<compile_context>
chip_gen: v5e
topology: v5e:2x2
jax: 0.10.0
libtpu: 0.0.40
codegen_flags: <defaults>
</compile_context>

<pallas_src>
import math

import jax
import jax.numpy as jnp
from jax.experimental import pallas as pl
from jax.experimental.pallas import tpu as pltpu


def _cross_sim_kernel(q_ref, da_ref, w_ref, o_ref):
    """One batch-block of sigmoid(q @ w @ da^T).

    q_ref:  (Bb*Lq, D)   f32   (batch and query length collapsed -> dense sublanes)
    da_ref: (Bb, La, D)  f32
    w_ref:  (D, D)       f32   (constant index_map: fetched once by the pipeline)
    o_ref:  (Bb*Lq, La)  f32
    """
    Bb, La, D = da_ref.shape
    Lq = q_ref.shape[0] // Bb

    q = q_ref[...]
    da = da_ref[...]
    w = w_ref[...]

    # First matmul: all Bb*Lq rows presented to the MXU in one call; bf16
    # operands (in-kernel cast, no extra HBM pass) with f32 accumulation.
    qw = jnp.dot(q.astype(jnp.bfloat16), w.astype(jnp.bfloat16),
                 preferred_element_type=jnp.float32)            # (Bb*Lq, D) f32

    # Second, batched contraction over the shared D axis, kept in f32 (no
    # qw->bf16 recast).  'bqd,bad->bqa' contracts da's last (lane) dim, so da
    # stays in its natural (La, D) layout -- no materialized transpose.
    s = jnp.einsum("bqd,bad->bqa", qw.reshape(Bb, Lq, D), da,
                   preferred_element_type=jnp.float32)          # (Bb, Lq, La) f32

    # Epilogue in f32 (v5e-safe); exp() runs on the EUP slot under the MXU/DMA.
    o_ref[...] = jax.nn.sigmoid(s).reshape(Bb * Lq, La).astype(o_ref.dtype)


def _pick_batch_block(B, Lq, La, D, *, target_rows=256, vmem_budget=8 << 20):
    """Pick the batch block Bb.

    * Bb*Lq is a multiple of 8 (dense sublanes / (8,128) block tiling).
    * Bb*Lq targets ~target_rows so the first matmul fills MXU passes and the
      ~0.35us per-grid-step overhead is amortized.
    * Resident VMEM (double-buffered q/da/out blocks + w) stays under
      vmem_budget (sized with v7x's 64 MiB VMEM in mind).
    * Keep >= 2 grid steps whenever B allows it (v7x has 2 TensorCores).
    """
    unit = 8 // math.gcd(Lq, 8)

    def round_up(x, m):
        return ((x + m - 1) // m) * m

    def footprint(bb):
        return 2 * 4 * (bb * Lq * D + bb * La * D + bb * Lq * La + D * D)

    bb = round_up(max(1, pl.cdiv(target_rows, Lq)), unit)
    bb = min(bb, round_up(B, unit))          # no point exceeding the (padded) batch
    while bb > unit and footprint(bb) > vmem_budget:
        bb -= unit
    two_step_cap = (B // (2 * unit)) * unit  # largest multiple of unit <= B/2
    if two_step_cap >= unit:
        bb = min(bb, two_step_cap)
    return max(bb, unit)


def cross_sim_forward(batch_q_em, batch_da_em, w):
    """sigmoid(batch_q_em @ w @ batch_da_em^T).unsqueeze(1) -> (B, 1, Lq, La)."""
    B, Lq, D = batch_q_em.shape
    Bd, La, Dd = batch_da_em.shape
    assert Bd == B and Dd == D and w.shape == (D, D)

    # Inputs stay f32 all the way into VMEM -- no wrapper-side dtype round trip.
    q = jnp.asarray(batch_q_em, jnp.float32)
    da = jnp.asarray(batch_da_em, jnp.float32)
    w = jnp.asarray(w, jnp.float32)

    Bb = _pick_batch_block(B, Lq, La, D)
    G = pl.cdiv(B, Bb)
    Bp = G * Bb
    if Bp != B:                              # awkward B: pad, slice the result
        pad = Bp - B
        q = jnp.pad(q, ((0, pad), (0, 0), (0, 0)))
        da = jnp.pad(da, ((0, pad), (0, 0), (0, 0)))

    # Collapse (B, Lq): free row-major reshape -> dense sublane packing and no
    # in-kernel reshape ahead of the first matmul.
    q2 = q.reshape(Bp * Lq, D)

    cost = pl.CostEstimate(
        flops=2 * Bp * Lq * D * (D + La),
        transcendentals=Bp * Lq * La,
        bytes_accessed=4 * (Bp * Lq * D + Bp * La * D + D * D + Bp * Lq * La),
    )

    out2 = pl.pallas_call(
        _cross_sim_kernel,
        out_shape=jax.ShapeDtypeStruct((Bp * Lq, La), jnp.float32),
        grid_spec=pltpu.PrefetchScalarGridSpec(
            num_scalar_prefetch=0,
            grid=(G,),
            in_specs=[
                pl.BlockSpec((Bb * Lq, D), lambda i: (i, 0)),
                pl.BlockSpec((Bb, La, D), lambda i: (i, 0, 0)),
                # Constant index_map -> the pipeline fetches w once and keeps it
                # resident (single-buffering only matters for very large D).
                pl.BlockSpec((D, D), lambda i: (0, 0)),
            ],
            # Output last (lane) dim is the caller's La: stores are fully dense
            # when La is a multiple of 128; padding La here would also force
            # padded da HBM traffic, so it is not done.
            out_specs=pl.BlockSpec((Bb * Lq, La), lambda i: (i, 0)),
        ),
        compiler_params=pltpu.CompilerParams(
            dimension_semantics=("parallel",),
            vmem_limit_bytes=32 * 1024 * 1024,
        ),
        cost_estimate=cost,
    )(q2, da, w)

    out = out2.reshape(Bp, Lq, La)[:B]
    # unsqueeze(1) in the wrapper keeps the pallas output 2-D and dense.
    return out[:, None, :, :]


def xavier_uniform(key, d):
    # torch.nn.init.xavier_uniform_ for a (D, D) weight: U(-a, a), a = sqrt(6/(D+D))
    bound = math.sqrt(6.0 / (d + d))
    return jax.random.uniform(key, (d, d), minval=-bound, maxval=bound,
                              dtype=jnp.float32)


if __name__ == "__main__":
    D = 32   # hidden dim
    B = 2    # batch
    Lq = 8   # query sequence length
    La = 8   # doc/answer sequence length

    key = jax.random.PRNGKey(0)
    k_w, k_q, k_da = jax.random.split(key, 3)

    w = xavier_uniform(k_w, D)
    batch_q_em = jax.random.normal(k_q, (B, Lq, D), dtype=jnp.float32)
    batch_da_em = jax.random.normal(k_da, (B, La, D), dtype=jnp.float32)

    out = cross_sim_forward(batch_q_em, batch_da_em, w)
    out = jax.block_until_ready(out)

    # Reference in f32; tolerance covers the bf16 MXU operands of the first matmul.
    ref = jax.nn.sigmoid(
        jnp.einsum("bqd,de,bae->bqa", batch_q_em, w, batch_da_em)
    )[:, None, :, :]
    assert out.shape == (B, 1, Lq, La), out.shape
    assert jnp.allclose(out, ref, atol=4e-2, rtol=4e-2)

    print("KERNEL_OK")
</pallas_src>

<mosaic_0001>
module attributes {stable_mosaic.version = 11 : i64} {
  func.func @_cross_sim_kernel(%arg0: i32, %arg1: memref<8x32xf32, #tpu.memory_space<vmem>>, %arg2: memref<1x8x32xf32, #tpu.memory_space<vmem>>, %arg3: memref<32x32xf32, #tpu.memory_space<vmem>>, %arg4: memref<8x8xf32, #tpu.memory_space<vmem>>) attributes {dimension_semantics = [#tpu.dimension_semantics<parallel>], iteration_bounds = array<i64: 2>, scalar_prefetch = 0 : i64, scratch_operands = 0 : i64, tpu.core_type = #tpu.core_type<tc>, window_params = [{transform_indices = @transform_0, window_bounds = array<i64: 8, 32>}, {transform_indices = @transform_1, window_bounds = array<i64: 1, 8, 32>}, {pipeline_mode = #tpu.pipeline_mode<synchronous>, transform_indices = @transform_2, window_bounds = array<i64: 32, 32>}, {transform_indices = @transform_3, window_bounds = array<i64: 8, 8>}]} {
    %c0 = arith.constant 0 : index
    %c0_0 = arith.constant 0 : index
    %0 = vector.load %arg1[%c0, %c0_0] : memref<8x32xf32, #tpu.memory_space<vmem>>, vector<8x32xf32>
    %c0_1 = arith.constant 0 : index
    %c0_2 = arith.constant 0 : index
    %c0_3 = arith.constant 0 : index
    %1 = vector.load %arg2[%c0_1, %c0_2, %c0_3] : memref<1x8x32xf32, #tpu.memory_space<vmem>>, vector<1x8x32xf32>
    %c0_4 = arith.constant 0 : index
    %c0_5 = arith.constant 0 : index
    %2 = vector.load %arg3[%c0_4, %c0_5] : memref<32x32xf32, #tpu.memory_space<vmem>>, vector<32x32xf32>
    %3 = arith.truncf %0 : vector<8x32xf32> to vector<8x32xbf16>
    %4 = arith.truncf %2 : vector<32x32xf32> to vector<32x32xbf16>
    %cst = arith.constant dense<0.000000e+00> : vector<8x32xf32>
    %5 = tpu.matmul %3, %4, %cst {dimension_numbers = #tpu.dot_dimension_numbers<[1], [0], [0], [1], [0, 0, 1, 1], [], []>} : vector<8x32xbf16>, vector<32x32xbf16>, vector<8x32xf32> -> vector<8x32xf32>
    %6 = vector.shape_cast %5 : vector<8x32xf32> to vector<1x8x32xf32>
    "tpu.trace_start"() <{level = 10 : i32, message = "bqd,bad->bqa"}> : () -> ()
    %cst_6 = arith.constant dense<0.000000e+00> : vector<1x8x8xf32>
    %7 = tpu.matmul %6, %1, %cst_6 {dimension_numbers = #tpu.dot_dimension_numbers<[2], [2], [1], [1], [0, 0, 0, 1, 1, 1], [0], [0]>} : vector<1x8x32xf32>, vector<1x8x32xf32>, vector<1x8x8xf32> -> vector<1x8x8xf32>
    "tpu.trace_stop"() : () -> ()
    %8 = arith.negf %7 : vector<1x8x8xf32>
    %9 = math.exp %8 : vector<1x8x8xf32>
    %cst_7 = arith.constant 1.000000e+00 : f32
    %10 = vector.broadcast %cst_7 : f32 to vector<1x8x8xf32>
    %11 = arith.addf %10, %9 : vector<1x8x8xf32>
    %12 = arith.divf %10, %11 : vector<1x8x8xf32>
    %13 = vector.shape_cast %12 : vector<1x8x8xf32> to vector<8x8xf32>
    %c0_8 = arith.constant 0 : index
    %c0_9 = arith.constant 0 : index
    %14 = vector.load %arg4[%c0_8, %c0_9] : memref<8x8xf32, #tpu.memory_space<vmem>>, vector<8x8xf32>
    tpu.vector_store %arg4[%c0_8, %c0_9], %13 {strides = array<i32>} : memref<8x8xf32, #tpu.memory_space<vmem>>, vector<8x8xf32>,
    return
  }
  func.func @transform_0(%arg0: i32) -> (i32, i32) {
    %c0_i32 = arith.constant 0 : i32
    %c0_i32_0 = arith.constant 0 : i32
    return %arg0, %c0_i32 : i32, i32
  }
  func.func @transform_1(%arg0: i32) -> (i32, i32, i32) {
    %c0_i32 = arith.constant 0 : i32
    %c0_i32_0 = arith.constant 0 : i32
    %c0_i32_1 = arith.constant 0 : i32
    return %arg0, %c0_i32, %c0_i32_0 : i32, i32, i32
  }
  func.func @transform_2(%arg0: i32) -> (i32, i32) {
    %c0_i32 = arith.constant 0 : i32
    %c0_i32_0 = arith.constant 0 : i32
    %c0_i32_1 = arith.constant 0 : i32
    return %c0_i32, %c0_i32_0 : i32, i32
  }
  func.func @transform_3(%arg0: i32) -> (i32, i32) {
    %c0_i32 = arith.constant 0 : i32
    %c0_i32_0 = arith.constant 0 : i32
    return %arg0, %c0_i32 : i32, i32
  }
}

</mosaic_0001>

<llo_original>
// kernel: tpu_custom_call.1
$region0: #{tpu_custom_call.1}
  #allocation0 [shape = 'u32[]', space=smem, size = 0x4, offset = 0x4, fixed_abs, tag = 'smem constant byte address 0x4 - core index']
  #allocation1 [shape = 'u32[72,128]{1,0:T(1,128)}', space=vmem, size = 0x9000, scoped, tag = 'internal scratch']
  %s0 = inlined_call_operand.hbm [shape: f32[16,32], index: 0, kind: input, shape index: {}]
  %s1 = inlined_call_operand.hbm [shape: f32[2,8,32], index: 1, kind: input, shape index: {}]
  %s2 = inlined_call_operand.hbm [shape: f32[32,32], index: 2, kind: input, shape index: {}]
  %s3 = inlined_call_operand.vmem [shape: f32[16,8], index: 3, kind: output, shape index: {}]
  %s4 = sld [smem:[#allocation0]]
  $region57: #{tpu_custom_call.1} parent=0
    _
  %s6 = ssub.s32 1, %s4
  %s7 = scalar_select 0, %s6, %s4
  $region1: #{tpu_custom_call.1} parent=0
    #allocation2 [shape = 'u8[8192]{0}', space=vmem, size = 0x2000, scoped, tag = 'input window, operand 0']
    #allocation3 [shape = 's32[2]{0}', space=sflag, size = 0x8, scoped, tag = 'scoped memory for tpu_custom_call.1']
    #allocation4 [shape = 'u8[8192]{0}', space=vmem, size = 0x2000, scoped, tag = 'input window, operand 1']
    #allocation5 [shape = 's32[2]{0}', space=sflag, size = 0x8, scoped, tag = 'scoped memory for tpu_custom_call.1']
    #allocation6 [shape = 'u8[16384]{0}', space=vmem, size = 0x4000, scoped, tag = 'input window, operand 2, single buffered']
    %8 = vsyncpa [#allocation3], 0
    %s9 = scalar_lea.sflag [#allocation3], 1
    %10 = vsyncpa %s9, 0
    %11 = vsyncpa [#allocation5], 0
    %s12 = scalar_lea.sflag [#allocation5], 1
    %13 = vsyncpa %s12, 0
    loop: start=0, step=1, limit=4
    $region2: #{tpu_custom_call.1} parent=1 // loop_pre_header
      _
    $region3: #{tpu_custom_call.1} parent=1 // loop_header
      %s15 = sphi 0, %s19
      %p16 = scmp.ge.s32.totalorder %s15, 4
      %s25 = sphi 0, %s27
      %s28 = sphi 0, %s25
      %s29 = sphi 0, %s28
      %s45 = sphi 0, %s29
      %s51 = sphi 0, %s53
      %s54 = sphi 0, %s51
      %s55 = sphi 0, %s54
      %s71 = sphi 0, %s55
      %s75 = sphi 0, %s75
      %s77 = sphi 0, %s75
      %s78 = sphi 0, %s77
      %s92 = sphi 0, %s78
      %s98 = sphi 0, %s100
      %s101 = sphi 0, %s98
      %s102 = sphi 0, %s101
      %s118 = sphi 0, %s102
    $region4: #{tpu_custom_call.1} parent=1 // loop_header_branch
      %18 = sbr.rel (%p16) target = $region8
    $region5: #{tpu_custom_call.1} parent=1 // loop_body
      %s20 = ssub.s32 %s15, 1
      %s21 = ssub.s32 %s15, 2
      %s22 = sadd.s32 %s15, 1
      %s23 = ssub.s32 %s15, %s22
      %p24 = scmp.eq.s32.totalorder %s23, 0
      %s26 = sadd.s32 %s25, 1
      %s27 = scalar_select %p24, %s25, %s26
      %p30 = pneg %p24
      %p31 = scmp.eq.s32.totalorder %s15, 1
      %p32 = por %p30, %p31
      %p33 = scmp.ne.s32.totalorder %s25, %s28
      %p34 = scmp.eq.s32.totalorder %s15, 0
      %p35 = por %p33, %p34
      %p36 = scmp.ne.s32.totalorder %s25, %s28
      %p37 = scmp.eq.s32.totalorder %s20, 1
      %p38 = por %p36, %p37
      %p39 = scmp.ne.s32.totalorder %s28, %s29
      %p40 = scmp.eq.s32.totalorder %s20, 0
      %p41 = por %p39, %p40
      %p42 = scmp.ne.s32.totalorder %s28, %s29
      %p43 = scmp.eq.s32.totalorder %s21, 1
      %p44 = por %p42, %p43
      %p46 = scmp.ne.s32.totalorder %s29, %s45
      %p47 = scmp.eq.s32.totalorder %s21, 0
      %p48 = por %p46, %p47
      %s49 = ssub.s32 %s15, %s22
      %p50 = scmp.eq.s32.totalorder %s49, 0
      %s52 = sadd.s32 %s51, 1
      %s53 = scalar_select %p50, %s51, %s52
      %p56 = pneg %p50
      %p57 = scmp.eq.s32.totalorder %s15, 1
      %p58 = por %p56, %p57
      %p59 = scmp.ne.s32.totalorder %s51, %s54
      %p60 = scmp.eq.s32.totalorder %s15, 0
      %p61 = por %p59, %p60
      %p62 = scmp.ne.s32.totalorder %s51, %s54
      %p63 = scmp.eq.s32.totalorder %s20, 1
      %p64 = por %p62, %p63
      %p65 = scmp.ne.s32.totalorder %s54, %s55
      %p66 = scmp.eq.s32.totalorder %s20, 0
      %p67 = por %p65, %p66
      %p68 = scmp.ne.s32.totalorder %s54, %s55
      %p69 = scmp.eq.s32.totalorder %s21, 1
      %p70 = por %p68, %p69
      %p72 = scmp.ne.s32.totalorder %s55, %s71
      %p73 = scmp.eq.s32.totalorder %s21, 0
      %p74 = por %p72, %p73
      %s76 = sadd.s32 %s75, 1
      %p79 = scmp.eq.s32.totalorder %s15, 1
      %p80 = scmp.ne.s32.totalorder %s75, %s77
      %p81 = scmp.eq.s32.totalorder %s15, 0
      %p82 = por %p80, %p81
      %p83 = scmp.ne.s32.totalorder %s75, %s77
      %p84 = scmp.eq.s32.totalorder %s20, 1
      %p85 = por %p83, %p84
      %p86 = scmp.ne.s32.totalorder %s77, %s78
      %p87 = scmp.eq.s32.totalorder %s20, 0
      %p88 = por %p86, %p87
      %p89 = scmp.ne.s32.totalorder %s77, %s78
      %p90 = scmp.eq.s32.totalorder %s21, 1
      %p91 = por %p89, %p90
      %p93 = scmp.ne.s32.totalorder %s78, %s92
      %p94 = scmp.eq.s32.totalorder %s21, 0
      %p95 = por %p93, %p94
      %s96 = ssub.s32 %s15, %s22
      %p97 = scmp.eq.s32.totalorder %s96, 0
      %s99 = sadd.s32 %s98, 1
      %s100 = scalar_select %p97, %s98, %s99
      %p103 = pneg %p97
      %p104 = scmp.eq.s32.totalorder %s15, 1
      %p105 = por %p103, %p104
      %p106 = scmp.ne.s32.totalorder %s98, %s101
      %p107 = scmp.eq.s32.totalorder %s15, 0
      %p108 = por %p106, %p107
      %p109 = scmp.ne.s32.totalorder %s98, %s101
      %p110 = scmp.eq.s32.totalorder %s20, 1
      %p111 = por %p109, %p110
      %p112 = scmp.ne.s32.totalorder %s101, %s102
      %p113 = scmp.eq.s32.totalorder %s20, 0
      %p114 = por %p112, %p113
      %p115 = scmp.ne.s32.totalorder %s101, %s102
      %p116 = scmp.eq.s32.totalorder %s21, 1
      %p117 = por %p115, %p116
      %p119 = scmp.ne.s32.totalorder %s102, %s118
      %p120 = scmp.eq.s32.totalorder %s21, 0
      %p121 = por %p119, %p120
      %p122 = scmp.le.s32.totalorder 1, %s15
      %p123 = scmp.lt.s32.totalorder %s15, 3
      %p124 = pnand %p122, %p123
      %p125 = pneg %p124
      // Predicated region
      $region9: #{tpu_custom_call.1} parent=5 // pred_check
        _
      $region10: #{tpu_custom_call.1} parent=5 // pred_check_branch
        %127 = sbr.rel (%p124) target = $region12
      $region11: #{tpu_custom_call.1} parent=5 // pred_region
        %s128 = ssub.s32 %s15, 1
        // Predicated region
        $region13: #{tpu_custom_call.1} parent=11 // pred_check
          %p129 = pneg %p88
        $region14: #{tpu_custom_call.1} parent=11 // pred_check_branch
          %131 = sbr.rel (%p129) target = $region16
        $region15: #{tpu_custom_call.1} parent=11 // pred_region
          %133 = vsyncadd [#allocation5], 0
          %s134 = sshll.u32 %s2, 4
          %s135 = int_to_ptr.hbm [resolvable:$true] %s134
          %s136 = sshll.u32 [#allocation6], 4
          %s137 = int_to_ptr.vmem [resolvable:$true] %s136
          %142 = dma.hbm_to_vmem [thread:$0]  %s135, 512, %s137, [#allocation5], 128, 128, 8
        $region16: #{tpu_custom_call.1} parent=11 // pred_fallthru
          _
      $region12: #{tpu_custom_call.1} parent=5 // pred_fallthru
        _
      %p143 = scmp.lt.s32.totalorder %s15, 2
      // Predicated region
      $region17: #{tpu_custom_call.1} parent=5 // pred_check
        %p144 = pneg %p143
      $region18: #{tpu_custom_call.1} parent=5 // pred_check_branch
        %146 = sbr.rel (%p144) target = $region20
      $region19: #{tpu_custom_call.1} parent=5 // pred_region
        // Predicated region
        $region21: #{tpu_custom_call.1} parent=19 // pred_check
          %p147 = pneg %p35
        $region22: #{tpu_custom_call.1} parent=19 // pred_check_branch
          %149 = sbr.rel (%p147) target = $region24
        $region23: #{tpu_custom_call.1} parent=19 // pred_region
          %s150 = sand.u32 %s25, 1
          %s151 = scalar_lea.sflag [#allocation3], %s150
          %s152 = sand.u32 %s25, 1
          %s153 = smul.addr %s152, 8
          %s154 = scalar_lea.vmem [#allocation2], %s153
          %156 = vsyncadd %s151, 0
          %s157 = smul.addr %s15, 8
          %s158 = scalar_lea.hbm %s0, %s157
          %s160 = sshll.u32 %s158, 4
          %s161 = int_to_ptr.hbm [resolvable:$true] %s160
          %s162 = sshll.u32 %s154, 4
          %s163 = int_to_ptr.vmem [resolvable:$true] %s162
          %165 = dma.hbm_to_vmem [thread:$0]  %s161, 128, %s163, %s151
        $region24: #{tpu_custom_call.1} parent=19 // pred_fallthru
          _
        // Predicated region
        $region25: #{tpu_custom_call.1} parent=19 // pred_check
          %p166 = pneg %p61
        $region26: #{tpu_custom_call.1} parent=19 // pred_check_branch
          %168 = sbr.rel (%p166) target = $region28
        $region27: #{tpu_custom_call.1} parent=19 // pred_region
          %s169 = sand.u32 %s15, 1
          %s170 = scalar_lea.sflag [#allocation5], %s169
          %s171 = sand.u32 %s51, 1
          %s172 = smul.addr %s171, 8
          %s173 = scalar_lea.vmem [#allocation4], %s172
          %175 = vsyncadd %s170, 0
          %s176 = smul.addr %s15, 8
          %s177 = scalar_lea.hbm %s1, %s176
          %s179 = sshll.u32 %s177, 4
          %s180 = int_to_ptr.hbm [resolvable:$true] %s179
          %s181 = sshll.u32 %s173, 4
          %s182 = int_to_ptr.vmem [resolvable:$true] %s181
          %184 = dma.hbm_to_vmem [thread:$0]  %s180, 128, %s182, %s170
        $region28: #{tpu_custom_call.1} parent=19 // pred_fallthru
          _
      $region20: #{tpu_custom_call.1} parent=5 // pred_fallthru
        _
      %p185 = scmp.le.s32.totalorder 1, %s15
      %p186 = scmp.lt.s32.totalorder %s15, 3
      %p187 = pnand %p185, %p186
      %p188 = pneg %p187
      // Predicated region
      $region29: #{tpu_custom_call.1} parent=5 // pred_check
        _
      $region30: #{tpu_custom_call.1} parent=5 // pred_check_branch
        %190 = sbr.rel (%p187) target = $region32
      $region31: #{tpu_custom_call.1} parent=5 // pred_region
        %s191 = ssub.s32 %s15, 1
        %s192 = sand.u32 %s28, 1
        %s193 = scalar_lea.sflag [#allocation3], %s192
        %s194 = sand.u32 %s28, 1
        %s195 = smul.addr %s194, 8
        %s196 = scalar_lea.vmem [#allocation2], %s195
        // Predicated region
        $region33: #{tpu_custom_call.1} parent=31 // pred_check
          %p197 = pneg %p41
        $region34: #{tpu_custom_call.1} parent=31 // pred_check_branch
          %199 = sbr.rel (%p197) target = $region36
        $region35: #{tpu_custom_call.1} parent=31 // pred_region
          %201 = dma.done %s193, 128
        $region36: #{tpu_custom_call.1} parent=31 // pred_fallthru
          _
        %s202 = sand.u32 %s20, 1
        %s203 = scalar_lea.sflag [#allocation5], %s202
        %s204 = sand.u32 %s54, 1
        %s205 = smul.addr %s204, 8
        %s206 = scalar_lea.vmem [#allocation4], %s205
        // Predicated region
        $region37: #{tpu_custom_call.1} parent=31 // pred_check
          %p207 = pneg %p67
        $region38: #{tpu_custom_call.1} parent=31 // pred_check_branch
          %209 = sbr.rel (%p207) target = $region40
        $region39: #{tpu_custom_call.1} parent=31 // pred_region
          %211 = dma.done %s203, 128
        $region40: #{tpu_custom_call.1} parent=31 // pred_fallthru
          _
        // Predicated region
        $region41: #{tpu_custom_call.1} parent=31 // pred_check
          %p212 = pneg %p88
        $region42: #{tpu_custom_call.1} parent=31 // pred_check_branch
          %214 = sbr.rel (%p212) target = $region44
        $region43: #{tpu_custom_call.1} parent=31 // pred_region
          %216 = dma.done [#allocation5], 512
        $region44: #{tpu_custom_call.1} parent=31 // pred_fallthru
          _
        %s217 = sand.u32 %s28, 1
        %s218 = scalar_lea.sflag [#allocation3], %s217
        %s219 = sand.u32 %s28, 1
        %s220 = smul.addr %s219, 8
        %s221 = scalar_lea.vmem [#allocation2], %s220
        %p222 = pneg %p41
        %p223 = pneg %p38
        %s224 = sand.u32 %s20, 1
        %s225 = scalar_lea.sflag [#allocation5], %s224
        %s226 = sand.u32 %s54, 1
        %s227 = smul.addr %s226, 8
        %s228 = scalar_lea.vmem [#allocation4], %s227
        %p229 = pneg %p67
        %p230 = pneg %p64
        %p231 = pneg %p88
        %p232 = pneg %p85
        %p233 = pneg %p114
        %p234 = pneg %p111
        %p235 = scmp.lt.s32.totalorder %s20, 1
        %s236 = scalar_select %p235, %s20, 1
        %s237 = smul.addr %s236, 8
        %s238 = scalar_lea.vmem %s3, %s237
        %p239 = scmp.lt.s32.totalorder %s20, 1
        %s240 = scalar_select %p239, %s20, 1
        %s241 = smul.addr %s240, 8
        %s242 = scalar_lea.vmem %s3, %s241
        %v244 = vld [vmem:[%s196] sm:$0xff]
        %v245 = vld [vmem:[%s206] sm:$0xff]
        %v246 = vld [vmem:[#allocation6] sm:$0xff]
        %v247 = vld [vmem:[#allocation6 + $0x8] sm:$0xff]
        %v248 = vld [vmem:[#allocation6 + $0x10] sm:$0xff]
        %v249 = vld [vmem:[#allocation6 + $0x18] sm:$0xff]
        %v250 = vpack.c.bf16 %v244, %v244
        %v251 = vpack.c.bf16 %v247, %v246
        %v252 = vpack.c.bf16 %v249, %v248
        %vm253 = vcmask 261120
        %v255 = vsel %vm253, %v250, 0
        %257 = vmatpush.bf16.msra.mxu0 0
        %258 = vmatpush.bf16.msra.mxu0 0
        %259 = vmatpush.bf16.msra.mxu0 0
        %260 = vmatpush.bf16.msra.mxu0 0
        %261 = vmatpush.bf16.msra.mxu0 0
        %262 = vmatpush.bf16.msra.mxu0 0
        %263 = vmatpush.bf16.msra.mxu0 %v252
        %264 = vmatpush.bf16.msra.mxu0 %v251
        %265 = vmatmul.bf16.gmra.mxu0 %v255
        %v266 = vpop.f32.mrf.mxu0
        %v267 = vadd.f32 0.0, %v266
        %v268 = vpop.f32.mrf.mxu0
        %269 = vdwg.mxu0
        %v271 = vsel %vm253, %v267, 0
        %v274 = vsel %vm253, %v245, 0
        %276 = vmatpush.xpose.msra.mxu0 0.0
        %277 = vmatpush.xpose.msra.mxu0 0.0
        %278 = vmatpush.xpose.msra.mxu0 0.0
        %279 = vmatpush.xpose.msra.mxu0 0.0
        %280 = vmatpush.xpose.msra.mxu0 0.0
        %281 = vmatpush.xpose.msra.mxu0 0.0
        %282 = vmatpush.xpose.msra.mxu0 0.0
        %283 = vmatpush.xpose.msra.mxu0 0.0
        %284 = vmatpush.xpose.msra.mxu0 0.0
        %285 = vmatpush.xpose.msra.mxu0 0.0
        %286 = vmatpush.xpose.msra.mxu0 0.0
        %287 = vmatpush.xpose.msra.mxu0 0.0
        %288 = vmatpush.xpose.msra.mxu0 0.0
        %289 = vmatpush.xpose.msra.mxu0 0.0
        %290 = vmatpush.xpose.msra.mxu0 0.0
        %291 = vmatpush.xpose.msra.mxu0 %v274
        %292 = vmatmul.f32.gmra.mxu0 %v271
        %v293 = vpop.f32.mrf.mxu0
        %v294 = vadd.f32 0.0, %v293
        %295 = vdwg.mxu0
        %v296 = vxor.u32 %v294, 2147483648
        %v297 = vmul.f32 %v296, 1.442695
        %v298 = vpow.pop %v297
        %v299 = vadd.f32 %v298, 1.0
        %v300 = vrcp.pop %v299
        %v301 = vmul.f32 %v299, %v300
        %v302 = vsub.f32 1.0, %v301
        %v303 = vmul.f32 %v300, %v302
        %v304 = vadd.f32 %v300, %v303
        %vm305 = vweird.f32 %v299
        %vm306 = vweird.f32 %v300
        %vm307 = vmor %vm305, %vm306
        %v308 = vsel %vm307, %v300, %v304
        %v309 = vand.u32 2147483647, %v299
        %vm310 = vcmp.eq.f32.partialorder %v309, 8.507059e+37
        %v311 = vand.u32 %v299, 2147483648
        %v312 = vor.u32 1.1754944e-38, %v311
        %v313 = vsel %vm310, %v312, %v308
        %v314 = vmul.f32 1.0, %v313
        %vm315 = vcmask 64512
        %316 = vst.msk [vmem:[%s242] sm:$0xff] %vm315, %v314
        %p317 = scmp.lt.s32.totalorder %s20, 1
        %s318 = scalar_select %p317, %s20, 1
        %s319 = smul.addr %s318, 8
        %s320 = scalar_lea.vmem %s3, %s319
        // Predicated region
        $region45: #{tpu_custom_call.1} parent=31 // pred_check
          %p321 = pneg %p111
        $region46: #{tpu_custom_call.1} parent=31 // pred_check_branch
          %323 = sbr.rel (%p321) target = $region48
        $region47: #{tpu_custom_call.1} parent=31 // pred_region
          _
        $region48: #{tpu_custom_call.1} parent=31 // pred_fallthru
          _
      $region32: #{tpu_custom_call.1} parent=5 // pred_fallthru
        _
      %p324 = scmp.le.s32.totalorder 2, %s15
      // Predicated region
      $region49: #{tpu_custom_call.1} parent=5 // pred_check
        %p325 = pneg %p324
      $region50: #{tpu_custom_call.1} parent=5 // pred_check_branch
        %327 = sbr.rel (%p325) target = $region52
      $region51: #{tpu_custom_call.1} parent=5 // pred_region
        %s328 = ssub.s32 %s15, 2
        // Predicated region
        $region53: #{tpu_custom_call.1} parent=51 // pred_check
          %p329 = pneg %p117
        $region54: #{tpu_custom_call.1} parent=51 // pred_check_branch
          %331 = sbr.rel (%p329) target = $region56
        $region55: #{tpu_custom_call.1} parent=51 // pred_region
          %p332 = scmp.lt.s32.totalorder %s21, 1
          %s333 = scalar_select %p332, %s21, 1
          %s334 = smul.addr %s333, 8
          %s335 = scalar_lea.vmem %s3, %s334
        $region56: #{tpu_custom_call.1} parent=51 // pred_fallthru
          _
      $region52: #{tpu_custom_call.1} parent=5 // pred_fallthru
        _
    $region6: #{tpu_custom_call.1} parent=1 // loop_footer
      %s19 = sadd.s32 1, %s15
    $region7: #{tpu_custom_call.1} parent=1 // loop_footer_branch
      %14 = sbr.rel target = $region3
    $region8: #{tpu_custom_call.1} parent=1 // loop_exit
      _
    %336 = vsyncpa [#allocation3], 1
    %s337 = scalar_lea.sflag [#allocation3], 1
    %338 = vsyncpa %s337, 1
    %339 = vsyncpa [#allocation5], 1
    %s340 = scalar_lea.sflag [#allocation5], 1
    %341 = vsyncpa %s340, 1

</llo_original>
